<compile_context>
chip_gen: v6e
topology: v6e:2x2x1
jax: 0.10.0
libtpu: 0.0.40
codegen_flags: <defaults>
</compile_context>

<pallas_src>
import jax
import jax.numpy as jnp
from jax import lax
from jax.experimental import pallas as pl
from jax.experimental.pallas import tpu as pltpu

EPS = 1e-5


def _make_layernorm_kernel(d: int):
    """Kernel over a (tile_rows, D) block; D is the full (unpadded) feature dim."""
    inv_d = 1.0 / float(d)

    def kernel(x_ref, w_ref, o_ref):
        x = x_ref[...].astype(jnp.float32)
        # Fused single-pass statistics (one read of the tile).
        s1 = jnp.sum(x, axis=-1, keepdims=True)
        s2 = jnp.sum(x * x, axis=-1, keepdims=True)
        mean = s1 * inv_d
        # Clamp to guard cancellation on near-constant rows.
        var = jnp.maximum(s2 * inv_d - mean * mean, 0.0)
        inv = lax.rsqrt(var + EPS)
        o_ref[...] = (((x - mean) * inv) * w_ref[...]).astype(o_ref.dtype)

    return kernel


def _pick_tile_rows(rows: int, d: int, in_itemsize: int, target_bytes: int = 4 << 20) -> int:
    """~4 MiB per block (sized by the larger of in/out row), multiple of 16 rows."""
    per_row = d * max(in_itemsize, 4)  # output rows are f32 by default
    t = (target_bytes // max(per_row, 1) // 16) * 16
    t = max(16, t)
    # Keep at least 2 grid steps when there is enough work (v7x megacore sharding).
    if rows >= 64:
        half = -(-rows // 2)
        half = -(-half // 16) * 16
        t = min(t, half)
    # Never bigger than the (rounded-up) row count.
    rows_up = -(-rows // 16) * 16
    return max(16, min(t, rows_up))


def layer_norm(x, weight, *, tile_rows=None, out_dtype=jnp.float32):
    """x: (B, S, D) any float dtype; weight: (D,). Returns out_dtype (default f32)."""
    assert x.ndim == 3, "expected (B, S, D)"
    B, S, D = x.shape
    assert weight.shape == (D,)
    rows = B * S

    in_itemsize = jnp.dtype(x.dtype).itemsize
    out_itemsize = jnp.dtype(out_dtype).itemsize
    if tile_rows is None:
        tile_rows = _pick_tile_rows(rows, D, in_itemsize)

    x2 = x.reshape(rows, D)                              # view, no copy
    w2 = weight.astype(jnp.float32).reshape(1, D)        # tiny, resident in VMEM

    grid = (pl.cdiv(rows, tile_rows),)

    # VMEM budget: double-buffered I/O blocks + in-kernel f32 temporaries (cast of x,
    # x*x, centered/normalized intermediate) + resident weight + headroom.
    block_in = tile_rows * D * in_itemsize
    block_out = tile_rows * D * out_itemsize
    temps = 3 * tile_rows * D * 4
    vmem_need = 2 * (block_in + block_out) + temps + 2 * D * 4
    vmem_limit = int(min(max(vmem_need + (4 << 20), 16 << 20), 48 << 20))

    kernel = _make_layernorm_kernel(D)

    out = pl.pallas_call(
        kernel,
        out_shape=jax.ShapeDtypeStruct((rows, D), out_dtype),
        grid_spec=pltpu.PrefetchScalarGridSpec(
            num_scalar_prefetch=0,
            grid=grid,
            in_specs=[
                pl.BlockSpec((tile_rows, D), lambda i: (i, 0)),
                pl.BlockSpec((1, D), lambda i: (0, 0)),   # weight resident across grid
            ],
            out_specs=pl.BlockSpec((tile_rows, D), lambda i: (i, 0)),
        ),
        compiler_params=pltpu.CompilerParams(
            dimension_semantics=("parallel",),
            vmem_limit_bytes=vmem_limit,
        ),
    )(x2, w2)

    return out.reshape(B, S, D)


def layer_norm_ref(x, weight):
    x = x.astype(jnp.float32)
    mean = jnp.mean(x, axis=-1, keepdims=True)
    var = jnp.mean((x - mean) ** 2, axis=-1, keepdims=True)
    return (x - mean) * lax.rsqrt(var + EPS) * weight[None, None, :].astype(jnp.float32)


if __name__ == "__main__":
    key = jax.random.PRNGKey(0)
    kx, kw, kx2, kx3, kw3 = jax.random.split(key, 5)

    # Primary small test (matches module usage: (B, S, D)).
    B, S, D = 2, 8, 32
    x = jax.random.normal(kx, (B, S, D), dtype=jnp.float32)
    weight = jnp.ones((D,), dtype=jnp.float32) + 0.1 * jax.random.normal(kw, (D,), dtype=jnp.float32)

    out = jax.block_until_ready(layer_norm(x, weight))
    ref = layer_norm_ref(x, weight)
    assert out.shape == (B, S, D) and out.dtype == jnp.float32
    assert jnp.allclose(out, ref, atol=1e-4, rtol=1e-4), "mismatch vs reference (f32)"

    # Partial-last-block path: rows not a multiple of tile_rows, bf16 input, f32 output.
    B2, S2 = 3, 7
    x_bf16 = jax.random.normal(kx2, (B2, S2, D), dtype=jnp.float32).astype(jnp.bfloat16)
    out2 = jax.block_until_ready(layer_norm(x_bf16, weight))
    ref2 = layer_norm_ref(x_bf16, weight)
    assert out2.shape == (B2, S2, D) and out2.dtype == jnp.float32
    assert jnp.allclose(out2, ref2, atol=2e-2, rtol=2e-2), "mismatch vs reference (bf16 in)"

    # Multi-step grid + partial last block + D not a multiple of 128 (masked stores).
    B3, S3, D3 = 2, 40, 160
    x3 = jax.random.normal(kx3, (B3, S3, D3), dtype=jnp.float32)
    w3 = jnp.ones((D3,), dtype=jnp.float32) + 0.1 * jax.random.normal(kw3, (D3,), dtype=jnp.float32)
    out3 = jax.block_until_ready(layer_norm(x3, w3, tile_rows=32))  # 80 rows -> 3 blocks, last partial
    ref3 = layer_norm_ref(x3, w3)
    assert out3.shape == (B3, S3, D3) and out3.dtype == jnp.float32
    assert jnp.allclose(out3, ref3, atol=1e-4, rtol=1e-4), "mismatch vs reference (multi-block)"

    print("KERNEL_OK")
</pallas_src>

<mosaic_0001>
module attributes {stable_mosaic.version = 11 : i64} {
  func.func @kernel(%arg0: i32, %arg1: memref<16x32xf32, #tpu.memory_space<vmem>>, %arg2: memref<1x32xf32, #tpu.memory_space<vmem>>, %arg3: memref<16x32xf32, #tpu.memory_space<vmem>>) attributes {dimension_semantics = [#tpu.dimension_semantics<parallel>], iteration_bounds = array<i64: 1>, scalar_prefetch = 0 : i64, scratch_operands = 0 : i64, tpu.core_type = #tpu.core_type<tc>, window_params = [{transform_indices = @transform_0, window_bounds = array<i64: 16, 32>}, {pipeline_mode = #tpu.pipeline_mode<synchronous>, transform_indices = @transform_1, window_bounds = array<i64: 1, 32>}, {transform_indices = @transform_2, window_bounds = array<i64: 16, 32>}]} {
    %c0 = arith.constant 0 : index
    %c0_0 = arith.constant 0 : index
    %0 = vector.load %arg1[%c0, %c0_0] : memref<16x32xf32, #tpu.memory_space<vmem>>, vector<16x32xf32>
    %cst = arith.constant dense<0.000000e+00> : vector<16xf32>
    %1 = vector.multi_reduction <add>, %0, %cst [1] : vector<16x32xf32> to vector<16xf32>
    %2 = vector.shape_cast %1 : vector<16xf32> to vector<16x1xf32>
    %3 = arith.mulf %0, %0 : vector<16x32xf32>
    %cst_1 = arith.constant dense<0.000000e+00> : vector<16xf32>
    %4 = vector.multi_reduction <add>, %3, %cst_1 [1] : vector<16x32xf32> to vector<16xf32>
    %5 = vector.shape_cast %4 : vector<16xf32> to vector<16x1xf32>
    %cst_2 = arith.constant 3.125000e-02 : f32
    %6 = vector.broadcast %cst_2 : f32 to vector<16x1xf32>
    %7 = arith.mulf %2, %6 : vector<16x1xf32>
    %cst_3 = arith.constant 3.125000e-02 : f32
    %8 = vector.broadcast %cst_3 : f32 to vector<16x1xf32>
    %9 = arith.mulf %5, %8 : vector<16x1xf32>
    %10 = arith.mulf %7, %7 : vector<16x1xf32>
    %11 = arith.subf %9, %10 : vector<16x1xf32>
    %cst_4 = arith.constant 0.000000e+00 : f32
    %12 = vector.broadcast %cst_4 : f32 to vector<16x1xf32>
    %13 = arith.maximumf %11, %12 : vector<16x1xf32>
    %cst_5 = arith.constant 9.99999974E-6 : f32
    %14 = vector.broadcast %cst_5 : f32 to vector<16x1xf32>
    %15 = arith.addf %13, %14 : vector<16x1xf32>
    %16 = math.rsqrt %15 : vector<16x1xf32>
    %17 = vector.broadcast %7 : vector<16x1xf32> to vector<16x32xf32>
    %18 = arith.subf %0, %17 : vector<16x32xf32>
    %19 = vector.broadcast %16 : vector<16x1xf32> to vector<16x32xf32>
    %20 = arith.mulf %18, %19 : vector<16x32xf32>
    %c0_6 = arith.constant 0 : index
    %c0_7 = arith.constant 0 : index
    %21 = vector.load %arg2[%c0_6, %c0_7] : memref<1x32xf32, #tpu.memory_space<vmem>>, vector<1x32xf32>
    %22 = vector.broadcast %21 : vector<1x32xf32> to vector<16x32xf32>
    %23 = arith.mulf %20, %22 : vector<16x32xf32>
    %c0_8 = arith.constant 0 : index
    %c0_9 = arith.constant 0 : index
    %24 = vector.load %arg3[%c0_8, %c0_9] : memref<16x32xf32, #tpu.memory_space<vmem>>, vector<16x32xf32>
    tpu.vector_store %arg3[%c0_8, %c0_9], %23 {strides = array<i32>} : memref<16x32xf32, #tpu.memory_space<vmem>>, vector<16x32xf32>,
    return
  }
  func.func @transform_0(%arg0: i32) -> (i32, i32) {
    %c0_i32 = arith.constant 0 : i32
    %c0_i32_0 = arith.constant 0 : i32
    return %arg0, %c0_i32 : i32, i32
  }
  func.func @transform_1(%arg0: i32) -> (i32, i32) {
    %c0_i32 = arith.constant 0 : i32
    %c0_i32_0 = arith.constant 0 : i32
    %c0_i32_1 = arith.constant 0 : i32
    return %c0_i32, %c0_i32_0 : i32, i32
  }
  func.func @transform_2(%arg0: i32) -> (i32, i32) {
    %c0_i32 = arith.constant 0 : i32
    %c0_i32_0 = arith.constant 0 : i32
    return %arg0, %c0_i32 : i32, i32
  }
}

</mosaic_0001>

<llo_original>
// kernel: tpu_custom_call.1
$region0: #{tpu_custom_call.1}
  #allocation0 [shape = 'u32[]', space=smem, size = 0x4, offset = 0x4, fixed_abs, tag = 'smem constant byte address 0x4 - core index']
  #allocation1 [shape = 'u32[144,128]{1,0:T(1,128)}', space=vmem, size = 0x12000, scoped, tag = 'internal scratch']
  %s0 = inlined_call_operand.hbm [shape: f32[16,32], index: 0, kind: input, shape index: {}]
  %s1 = inlined_call_operand.vmem [shape: f32[1,32], index: 1, kind: input, shape index: {}]
  %s2 = inlined_call_operand.hbm [shape: f32[16,32], index: 2, kind: output, shape index: {}]
  %s3 = sld [smem:[#allocation0]]
  $region22: #{tpu_custom_call.1} parent=0
    _
  %s5 = ssub.s32 1, %s3
  %s6 = scalar_select 0, %s5, %s3
  $region1: #{tpu_custom_call.1} parent=0
    #allocation2 [shape = 'u8[8192]{0}', space=vmem, size = 0x2000, scoped, tag = 'input window, operand 0, single buffered']
    #allocation3 [shape = 's32[1]{0}', space=sflag, size = 0x4, scoped, tag = 'scoped memory for tpu_custom_call.1']
    #allocation4 [shape = 's32[1]{0}', space=sflag, size = 0x4, scoped, tag = 'scoped memory for tpu_custom_call.1']
    #allocation5 [shape = 'u8[8192]{0}', space=vmem, size = 0x2000, scoped, tag = 'output window, operand 0, single buffered']
    %7 = vsyncpa [#allocation3], 0
    %8 = vsyncpa [#allocation4], 0
    // Predicated region
    $region2: #{tpu_custom_call.1} parent=1 // pred_check
      _
    $region3: #{tpu_custom_call.1} parent=1 // pred_check_branch
      %10 = sbr.rel (0) target = $region5
    $region4: #{tpu_custom_call.1} parent=1 // pred_region
      %s12 = ssub.s32 256, 256
      %13 = vsyncadd [#allocation3], %s12
      %s14 = sshll.u32 [#allocation2], 4
      %s15 = int_to_ptr.vmem [resolvable:$true] %s14
      %20 = dma.hbm_to_vmem [thread:$0]  %s0, 256, %s15, [#allocation3], 128, 128, 8
    $region5: #{tpu_custom_call.1} parent=1 // pred_fallthru
      _
    // Predicated region
    $region6: #{tpu_custom_call.1} parent=1 // pred_check
      _
    $region7: #{tpu_custom_call.1} parent=1 // pred_check_branch
      %22 = sbr.rel (0) target = $region9
    $region8: #{tpu_custom_call.1} parent=1 // pred_region
      _
    $region9: #{tpu_custom_call.1} parent=1 // pred_fallthru
      _
    // Predicated region
    $region10: #{tpu_custom_call.1} parent=1 // pred_check
      _
    $region11: #{tpu_custom_call.1} parent=1 // pred_check_branch
      %24 = sbr.rel (0) target = $region13
    $region12: #{tpu_custom_call.1} parent=1 // pred_region
      %25 = dma.done [#allocation3], 256
    $region13: #{tpu_custom_call.1} parent=1 // pred_fallthru
      _
    %v26 = vld [vmem:[#allocation2] sm:$0xff]
    %v27 = vld [vmem:[#allocation2 + $0x8] sm:$0xff]
    %vm28 = vcmask 261120
    %v29 = vsel %vm28, %v26, 0.0
    %30 = vadd.xlane.f32.xlu0 %v29
    %v31 = vpop.xlane.xlu0 %30
    %v32 = vsel %vm28, %v27, 0.0
    %33 = vadd.xlane.f32.xlu0 %v32
    %v34 = vpop.xlane.xlu0 %33
    %v35 = vmul.f32 %v26, %v26
    %v36 = vmul.f32 %v27, %v27
    %v37 = vsel %vm28, %v35, 0.0
    %38 = vadd.xlane.f32.xlu0 %v37
    %v39 = vpop.xlane.xlu0 %38
    %v40 = vsel %vm28, %v36, 0.0
    %41 = vadd.xlane.f32.xlu0 %v40
    %v42 = vpop.xlane.xlu0 %41
    %v43 = vmul.f32 %v31, 0.03125
    %v44 = vmul.f32 %v34, 0.03125
    %v45 = vmul.f32 %v39, 0.03125
    %v46 = vmul.f32 %v42, 0.03125
    %v47 = vmul.f32 %v43, %v43
    %v48 = vmul.f32 %v44, %v44
    %v49 = vsub.f32 %v45, %v47
    %v50 = vsub.f32 %v46, %v48
    %v51 = vmax.f32 %v49, 0.0
    %v52 = vmax.f32 %v50, 0.0
    %v53 = vadd.f32 %v51, 1e-05
    %v54 = vadd.f32 %v52, 1e-05
    %v55 = vrsqrt.pop %v53
    %v56 = vrsqrt.pop %v54
    %v57 = vsub.f32 %v26, %v43
    %v58 = vsub.f32 %v27, %v44
    %v59 = vmul.f32 %v57, %v55
    %v60 = vmul.f32 %v58, %v56
    %v61 = vld [vmem:[%s1] sm:$0x1]
    %v63 = vlaneseq
    %v64 = vshrl.u32 %v63, 7
    %v65 = vsub.s32 0, %v64
    %v66 = vrot.slane %v61, %v65
    %v68 = vmul.f32 %v59, %v66
    %v69 = vmul.f32 %v60, %v66
    %70 = vst.msk [vmem:[#allocation5] sm:$0xff] %vm28, %v68
    %71 = vst.msk [vmem:[#allocation5 + $0x8] sm:$0xff] %vm28, %v69
    // Predicated region
    $region14: #{tpu_custom_call.1} parent=1 // pred_check
      _
    $region15: #{tpu_custom_call.1} parent=1 // pred_check_branch
      %73 = sbr.rel (0) target = $region17
    $region16: #{tpu_custom_call.1} parent=1 // pred_region
      %s75 = ssub.s32 256, 256
      %76 = vsyncadd [#allocation4], %s75
      %s77 = sshll.u32 [#allocation5], 4
      %s78 = int_to_ptr.vmem [resolvable:$true] %s77
      %83 = dma.vmem_to_hbm [thread:$0]  %s78, 256, %s2, [#allocation4], 128, 128, 8
    $region17: #{tpu_custom_call.1} parent=1 // pred_fallthru
      _
    // Predicated region
    $region18: #{tpu_custom_call.1} parent=1 // pred_check
      _
    $region19: #{tpu_custom_call.1} parent=1 // pred_check_branch
      %85 = sbr.rel (0) target = $region21
    $region20: #{tpu_custom_call.1} parent=1 // pred_region
      %86 = dma.done [#allocation4], 256
    $region21: #{tpu_custom_call.1} parent=1 // pred_fallthru
      _
    %87 = vsyncpa [#allocation3], 1
    %88 = vsyncpa [#allocation4], 1

</llo_original>
